<compile_context>
chip_gen: v5e
topology: v5e:2x2
jax: 0.10.0
libtpu: 0.0.40
codegen_flags: <defaults>
</compile_context>

<pallas_src>
import jax
import jax.numpy as jnp
from jax.experimental import pallas as pl
from jax.experimental.pallas import tpu as pltpu


# ---------------------------------------------------------------------------
# Pallas kernel: one MXU matmul per packed-row tile (bias already folded in)
#   out[tile, pack*EMB] = X[tile, pack*K_pad] @ A_blk[pack*K_pad, pack*EMB]
# ---------------------------------------------------------------------------
def hhea_kernel(x_ref, a_ref, out_ref):
    out_ref[...] = jnp.dot(
        x_ref[...], a_ref[...], preferred_element_type=jnp.float32
    ).astype(out_ref.dtype)


# ---------------------------------------------------------------------------
# Host-side helpers (plain JAX; run once, not per forward)
# ---------------------------------------------------------------------------
def _dot_hp(a, b):
    return jnp.dot(a, b, precision=jax.lax.Precision.HIGHEST)


def _round_up(x, m):
    return ((x + m - 1) // m) * m


def _num_tensorcores():
    """v7x exposes 2 TensorCores per chip; v5e/v6e have 1."""
    try:
        kind = jax.devices()[0].device_kind.lower()
    except Exception:
        return 1
    return 2 if "v7" in kind else 1


def time2vec_table(tau, w, b, w0, b0, fcw, fcb):
    """Time2Vec(CosineActivation(1, H) -> Linear(H, H)) evaluated on tau."""
    v1 = jnp.cos(_dot_hp(tau, w) + b)                      # [T, H-1]
    v2 = _dot_hp(tau, w0) + b0                             # [T, 1]
    return _dot_hp(jnp.concatenate([v1, v2], axis=1), fcw) + fcb   # [T, H]


def compose_affine(tsf, params, time_span):
    """Collapse the (dropout-free) affine branch stack into (A, bias)."""
    (w_n0, b_n0, w_n, b_n,
     w_t0, b_t0, w_t, b_t,
     w_d0, b_d0, w_d, b_d,
     wf_name, wf_time, wf_dw, bf) = params

    a_name = _dot_hp(_dot_hp(w_n0, w_n), wf_name)                          # [NAME, EMB]
    a_time = _dot_hp(_dot_hp(_dot_hp(tsf / time_span, w_t0), w_t), wf_time)   # [T, EMB]
    a_dw = _dot_hp(_dot_hp(w_d0, w_d), wf_dw)                              # [DW, EMB]

    bias = (_dot_hp(_dot_hp(b_n0, w_n) + b_n, wf_name)
            + _dot_hp(_dot_hp(b_t0, w_t) + b_t, wf_time)
            + _dot_hp(_dot_hp(b_d0, w_d) + b_d, wf_dw)
            + bf)                                                          # [1, EMB]

    A = jnp.concatenate([a_name, a_time, a_dw], axis=0)                    # [K, EMB]
    return A, bias


def prepare_packed_weights(t2v_params, params, *, time_span, emb_size,
                           pack=4, compute_dtype=jnp.bfloat16):
    """Composed weight with bias folded in (row K) and block-diag row packing."""
    tau = jnp.arange(time_span, dtype=jnp.float32)[:, None]
    tsf = time2vec_table(tau, *t2v_params)                  # [T, 32]
    A, bias = compose_affine(tsf, params, time_span)        # [K, EMB], [1, EMB]
    K = A.shape[0]
    k_pad = _round_up(K + 1, 128)                           # +1 bias column

    A_pad = jnp.zeros((k_pad, emb_size), jnp.float32)
    A_pad = A_pad.at[:K, :].set(A).at[K, :].set(bias[0])    # bias folded in
    A_pad = A_pad.astype(compute_dtype)

    A_blk = jnp.zeros((pack * k_pad, pack * emb_size), compute_dtype)
    for p in range(pack):                                   # block-diag of `pack` copies
        A_blk = A_blk.at[p * k_pad:(p + 1) * k_pad,
                         p * emb_size:(p + 1) * emb_size].set(A_pad)
    return A_blk, K, k_pad


def prepare_packed_inputs(name_emb, time_emb, dw_emb, *, k, k_pad,
                          pack=4, compute_dtype=jnp.bfloat16):
    """One-time packing of the entity embeddings into a lane-dense bf16 slab."""
    N = name_emb.shape[0]
    X = jnp.concatenate([name_emb, time_emb, dw_emb], axis=1)    # [N, K]
    n_pad = _round_up(N, pack)
    Xp = jnp.zeros((n_pad, k_pad), compute_dtype)
    Xp = Xp.at[:N, :k].set(X.astype(compute_dtype))
    Xp = Xp.at[:N, k].set(1.0)                                   # folded-bias column
    return Xp.reshape(n_pad // pack, pack * k_pad), N


# ---------------------------------------------------------------------------
# The per-forward path: a single pallas_call over packed rows
# ---------------------------------------------------------------------------
def hhea_matmul(X_packed, A_blk, *, emb_size, pack, tile_n=8192,
                out_dtype=jnp.bfloat16, num_cores=None,
                vmem_cap_bytes=48 << 20):
    n_pack, kw = X_packed.shape                      # kw = pack * k_pad
    out_w = pack * emb_size
    assert A_blk.shape == (kw, out_w)
    if num_cores is None:
        num_cores = _num_tensorcores()

    bytes_in = jnp.dtype(X_packed.dtype).itemsize
    bytes_out = jnp.dtype(out_dtype).itemsize
    w_bytes = A_blk.size * jnp.dtype(A_blk.dtype).itemsize

    # Grid floor: >= 2 steps per TensorCore on multi-core (v7x); otherwise
    # allow grid=(1,) so small/medium N runs without per-step overhead.
    min_steps = 2 * num_cores if num_cores > 1 else 1
    tile = min(tile_n, pl.cdiv(n_pack, min_steps))
    # Clamp so the double-buffered working set stays inside the VMEM budget.
    per_row = 2 * (kw * bytes_in + out_w * bytes_out)          # in + out, x2 buffers
    budget = vmem_cap_bytes - 2 * w_bytes - (2 << 20)
    tile = min(tile, max(8, budget // per_row))
    tile = _round_up(max(tile, 8), 8)                          # sublane alignment

    grid = pl.cdiv(n_pack, tile)
    n_pack_pad = grid * tile
    if n_pack_pad != n_pack:
        X_packed = jnp.zeros((n_pack_pad, kw), X_packed.dtype).at[:n_pack].set(X_packed)

    vmem_limit = int(min(max(2 * w_bytes + tile * per_row + (2 << 20), 16 << 20),
                         vmem_cap_bytes))

    out = pl.pallas_call(
        hhea_kernel,
        out_shape=jax.ShapeDtypeStruct((n_pack_pad, out_w), out_dtype),
        grid=(grid,),
        in_specs=[
            pl.BlockSpec((tile, kw), lambda i: (i, 0)),        # packed entity slab
            pl.BlockSpec((kw, out_w), lambda i: (0, 0)),       # composed block-diag W
        ],
        out_specs=pl.BlockSpec((tile, out_w), lambda i: (i, 0)),
        compiler_params=pltpu.CompilerParams(
            dimension_semantics=("parallel",),
            vmem_limit_bytes=vmem_limit),
    )(X_packed, A_blk)

    # Free reshape back to one entity per row (row-major packing).
    return out.reshape(n_pack_pad * pack, emb_size)


def simple_hhea_forward(name_emb, time_emb, dw_emb, t2v_params, params, *,
                        time_span, emb_size, pack=4, tile_n=8192,
                        compute_dtype=jnp.bfloat16, out_dtype=jnp.bfloat16):
    """Convenience wrapper: prep + kernel.  For repeated calls, hoist the prep."""
    A_blk, K, k_pad = prepare_packed_weights(
        t2v_params, params, time_span=time_span, emb_size=emb_size,
        pack=pack, compute_dtype=compute_dtype)
    X_packed, N = prepare_packed_inputs(
        name_emb, time_emb, dw_emb, k=K, k_pad=k_pad,
        pack=pack, compute_dtype=compute_dtype)
    out = hhea_matmul(X_packed, A_blk, emb_size=emb_size, pack=pack,
                      tile_n=tile_n, out_dtype=out_dtype)
    return out if out.shape[0] == N else out[:N]   # slice only when unaligned


# ---------------------------------------------------------------------------
# Pure-JAX reference of the original layered module (sanity check)
# ---------------------------------------------------------------------------
def reference(name_emb, time_emb, dw_emb, tau, t2v_params, params, time_span):
    dot = _dot_hp
    (w_c, b_c, w0_c, b0_c, fcw, fcb) = t2v_params
    v1 = jnp.cos(dot(tau, w_c) + b_c)
    v2 = dot(tau, w0_c) + b0_c
    tsf = dot(jnp.concatenate([v1, v2], axis=1), fcw) + fcb

    (w_n0, b_n0, w_n, b_n,
     w_t0, b_t0, w_t, b_t,
     w_d0, b_d0, w_d, b_d,
     wf_name, wf_time, wf_dw, bf) = params

    name_feat = dot(dot(name_emb, w_n0) + b_n0, w_n) + b_n
    te = dot(time_emb, tsf) / time_span
    time_feat = dot(dot(te, w_t0) + b_t0, w_t) + b_t
    dw_feat = dot(dot(dw_emb, w_d0) + b_d0, w_d) + b_d
    wf = jnp.concatenate([wf_name, wf_time, wf_dw], axis=0)
    cat = jnp.concatenate([name_feat, time_feat, dw_feat], axis=1)
    return dot(cat, wf) + bf


# ---------------------------------------------------------------------------
if __name__ == "__main__":
    # problem sizes (small but representative)
    N = 256            # number of entities
    NAME_DIM = 64      # ent_name_emb feature dim
    DW_DIM = 32        # ent_dw_emb feature dim
    TIME_SPAN = 24     # T
    EMB = 64           # emb_size
    STRUCT = 8         # structure_size
    TSIZE = 8          # time_size
    H = 32             # Time2Vec hidden dim
    PACK = 4           # rows packed per MXU row (lane-dense 256-wide output)

    key = jax.random.PRNGKey(0)
    ks = iter(jax.random.split(key, 32))

    def rnd(shape, scale=0.1):
        return (scale * jax.random.normal(next(ks), shape)).astype(jnp.float32)

    # entity embeddings (module __init__ inputs)
    ent_name_emb = rnd((N, NAME_DIM), 1.0)
    ent_time_emb = rnd((N, TIME_SPAN), 1.0)
    ent_dw_emb = rnd((N, DW_DIM), 1.0)

    # Time2Vec / CosineActivation parameters
    t2v_w = rnd((1, H - 1), 1.0)
    t2v_b = rnd((1, H - 1), 1.0)
    t2v_w0 = rnd((1, 1), 1.0)
    t2v_b0 = rnd((1, 1), 1.0)
    t2v_fcw = rnd((H, H))
    t2v_fcb = rnd((1, H))
    t2v_params = (t2v_w, t2v_b, t2v_w0, t2v_b0, t2v_fcw, t2v_fcb)

    # Linear layers (weights stored as [in, out])
    w_n0, b_n0 = rnd((NAME_DIM, EMB)), rnd((1, EMB))        # fc_name_0
    w_n, b_n = rnd((EMB, EMB)), rnd((1, EMB))               # fc_name
    w_t0, b_t0 = rnd((H, H)), rnd((1, H))                   # fc_time_0
    w_t, b_t = rnd((H, TSIZE)), rnd((1, TSIZE))             # fc_time
    w_d0, b_d0 = rnd((DW_DIM, EMB)), rnd((1, EMB))          # fc_dw_0
    w_d, b_d = rnd((EMB, STRUCT)), rnd((1, STRUCT))         # fc_dw
    # fc_final [EMB+TSIZE+STRUCT, EMB], split along the concat axis
    wf_name = rnd((EMB, EMB))
    wf_time = rnd((TSIZE, EMB))
    wf_dw = rnd((STRUCT, EMB))
    bf = rnd((1, EMB))

    params = (w_n0, b_n0, w_n, b_n,
              w_t0, b_t0, w_t, b_t,
              w_d0, b_d0, w_d, b_d,
              wf_name, wf_time, wf_dw, bf)

    # --- one-time prep (hoisted out of the per-forward path) ---
    A_blk, K, K_pad = prepare_packed_weights(
        t2v_params, params, time_span=TIME_SPAN, emb_size=EMB, pack=PACK)
    X_packed, n_valid = prepare_packed_inputs(
        ent_name_emb, ent_time_emb, ent_dw_emb, k=K, k_pad=K_pad, pack=PACK)

    # --- per-forward path: single fused pallas_call ---
    out = hhea_matmul(X_packed, A_blk, emb_size=EMB, pack=PACK,
                      out_dtype=jnp.bfloat16)
    out = out if out.shape[0] == n_valid else out[:n_valid]
    out = jax.block_until_ready(out)

    tau = jnp.arange(TIME_SPAN, dtype=jnp.float32)[:, None]
    ref = reference(ent_name_emb, ent_time_emb, ent_dw_emb, tau,
                    t2v_params, params, TIME_SPAN)
    assert out.shape == (N, EMB)
    # bf16 inputs/weights/output with f32 accumulation -> small absolute error
    assert jnp.allclose(out.astype(jnp.float32), ref,
                        atol=3e-2, rtol=3e-2), "mismatch vs reference"

    print("KERNEL_OK")
</pallas_src>

<mosaic_0001>
module attributes {stable_mosaic.version = 11 : i64} {
  func.func @hhea_kernel(%arg0: i32, %arg1: memref<64x512xbf16, #tpu.memory_space<vmem>>, %arg2: memref<512x256xbf16, #tpu.memory_space<vmem>>, %arg3: memref<64x256xbf16, #tpu.memory_space<vmem>>) attributes {dimension_semantics = [#tpu.dimension_semantics<parallel>], iteration_bounds = array<i64: 1>, scalar_prefetch = 0 : i64, scratch_operands = 0 : i64, tpu.core_type = #tpu.core_type<tc>, window_params = [{transform_indices = @transform_0, window_bounds = array<i64: 64, 512>}, {pipeline_mode = #tpu.pipeline_mode<synchronous>, transform_indices = @transform_1, window_bounds = array<i64: 512, 256>}, {transform_indices = @transform_2, window_bounds = array<i64: 64, 256>}]} {
    %c0 = arith.constant 0 : index
    %c0_0 = arith.constant 0 : index
    %0 = vector.load %arg1[%c0, %c0_0] : memref<64x512xbf16, #tpu.memory_space<vmem>>, vector<64x512xbf16>
    %c0_1 = arith.constant 0 : index
    %c0_2 = arith.constant 0 : index
    %1 = vector.load %arg2[%c0_1, %c0_2] : memref<512x256xbf16, #tpu.memory_space<vmem>>, vector<512x256xbf16>
    %cst = arith.constant dense<0.000000e+00> : vector<64x256xf32>
    %2 = tpu.matmul %0, %1, %cst {dimension_numbers = #tpu.dot_dimension_numbers<[1], [0], [0], [1], [0, 0, 1, 1], [], []>} : vector<64x512xbf16>, vector<512x256xbf16>, vector<64x256xf32> -> vector<64x256xf32>
    %3 = arith.truncf %2 : vector<64x256xf32> to vector<64x256xbf16>
    %c0_3 = arith.constant 0 : index
    %c0_4 = arith.constant 0 : index
    %4 = vector.load %arg3[%c0_3, %c0_4] : memref<64x256xbf16, #tpu.memory_space<vmem>>, vector<64x256xbf16>
    tpu.vector_store %arg3[%c0_3, %c0_4], %3 {strides = array<i32>} : memref<64x256xbf16, #tpu.memory_space<vmem>>, vector<64x256xbf16>,
    return
  }
  func.func @transform_0(%arg0: i32) -> (i32, i32) {
    %c0_i32 = arith.constant 0 : i32
    %c0_i32_0 = arith.constant 0 : i32
    return %arg0, %c0_i32 : i32, i32
  }
  func.func @transform_1(%arg0: i32) -> (i32, i32) {
    %c0_i32 = arith.constant 0 : i32
    %c0_i32_0 = arith.constant 0 : i32
    %c0_i32_1 = arith.constant 0 : i32
    return %c0_i32, %c0_i32_0 : i32, i32
  }
  func.func @transform_2(%arg0: i32) -> (i32, i32) {
    %c0_i32 = arith.constant 0 : i32
    %c0_i32_0 = arith.constant 0 : i32
    return %arg0, %c0_i32 : i32, i32
  }
}

</mosaic_0001>

<llo_original>
// kernel: tpu_custom_call.1
$region0: #{tpu_custom_call.1}
  #allocation0 [shape = 'u32[]', space=smem, size = 0x4, offset = 0x4, fixed_abs, tag = 'smem constant byte address 0x4 - core index']
  #allocation1 [shape = 'u32[72,128]{1,0:T(1,128)}', space=vmem, size = 0x9000, scoped, tag = 'internal scratch']
  %s0 = inlined_call_operand.hbm [shape: bf16[64,512], index: 0, kind: input, shape index: {}]
  %s1 = inlined_call_operand.hbm [shape: bf16[512,256], index: 1, kind: input, shape index: {}]
  %s2 = inlined_call_operand.hbm [shape: bf16[64,256], index: 2, kind: output, shape index: {}]
  %s3 = sld [smem:[#allocation0]]
  $region26: #{tpu_custom_call.1} parent=0
    _
  %s5 = ssub.s32 1, %s3
  %s6 = scalar_select 0, %s5, %s3
  $region1: #{tpu_custom_call.1} parent=0
    #allocation2 [shape = 'u8[65536]{0}', space=vmem, size = 0x10000, scoped, tag = 'input window, operand 0, single buffered']
    #allocation3 [shape = 's32[1]{0}', space=sflag, size = 0x4, scoped, tag = 'scoped memory for tpu_custom_call.1']
    #allocation4 [shape = 's32[1]{0}', space=sflag, size = 0x4, scoped, tag = 'scoped memory for tpu_custom_call.1']
    #allocation5 [shape = 'u8[262144]{0}', space=vmem, size = 0x40000, scoped, tag = 'input window, operand 1, single buffered']
    #allocation6 [shape = 's32[1]{0}', space=sflag, size = 0x4, scoped, tag = 'scoped memory for tpu_custom_call.1']
    #allocation7 [shape = 'u8[32768]{0}', space=vmem, size = 0x8000, scoped, tag = 'output window, operand 0, single buffered']
    %7 = vsyncpa [#allocation3], 0
    %8 = vsyncpa [#allocation6], 0
    %9 = vsyncpa [#allocation4], 0
    // Predicated region
    $region2: #{tpu_custom_call.1} parent=1 // pred_check
      _
    $region3: #{tpu_custom_call.1} parent=1 // pred_check_branch
      %11 = sbr.rel (0) target = $region5
    $region4: #{tpu_custom_call.1} parent=1 // pred_region
      %13 = vsyncadd [#allocation3], 0
      %s14 = sshll.u32 %s0, 4
      %s15 = int_to_ptr.hbm [resolvable:$true] %s14
      %s16 = sshll.u32 [#allocation2], 4
      %s17 = int_to_ptr.vmem [resolvable:$true] %s16
      %22 = dma.hbm_to_vmem [thread:$0]  %s15, 2048, %s17, [#allocation3], 256, 256, 16
    $region5: #{tpu_custom_call.1} parent=1 // pred_fallthru
      _
    // Predicated region
    $region6: #{tpu_custom_call.1} parent=1 // pred_check
      _
    $region7: #{tpu_custom_call.1} parent=1 // pred_check_branch
      %24 = sbr.rel (0) target = $region9
    $region8: #{tpu_custom_call.1} parent=1 // pred_region
      %26 = vsyncadd [#allocation6], 0
      %s27 = sshll.u32 %s1, 4
      %s28 = int_to_ptr.hbm [resolvable:$true] %s27
      %s29 = sshll.u32 [#allocation5], 4
      %s30 = int_to_ptr.vmem [resolvable:$true] %s29
      %35 = dma.hbm_to_vmem [thread:$0]  %s28, 8192, %s30, [#allocation6], 128, 128, 8
    $region9: #{tpu_custom_call.1} parent=1 // pred_fallthru
      _
    // Predicated region
    $region10: #{tpu_custom_call.1} parent=1 // pred_check
      _
    $region11: #{tpu_custom_call.1} parent=1 // pred_check_branch
      %37 = sbr.rel (0) target = $region13
    $region12: #{tpu_custom_call.1} parent=1 // pred_region
      %39 = dma.done [#allocation3], 2048
    $region13: #{tpu_custom_call.1} parent=1 // pred_fallthru
      _
    // Predicated region
    $region14: #{tpu_custom_call.1} parent=1 // pred_check
      _
    $region15: #{tpu_custom_call.1} parent=1 // pred_check_branch
      %41 = sbr.rel (0) target = $region17
    $region16: #{tpu_custom_call.1} parent=1 // pred_region
      %43 = dma.done [#allocation6], 8192
    $region17: #{tpu_custom_call.1} parent=1 // pred_fallthru
      _
    %v44 = vld [vmem:[#allocation2] sm:$0xff]
    %v45 = vld [vmem:[#allocation2 + $0x8] sm:$0xff]
    %v46 = vld [vmem:[#allocation2 + $0x10] sm:$0xff]
    %v47 = vld [vmem:[#allocation2 + $0x18] sm:$0xff]
    %v48 = vld [vmem:[#allocation2 + $0x20] sm:$0xff]
    %v49 = vld [vmem:[#allocation2 + $0x28] sm:$0xff]
    %v50 = vld [vmem:[#allocation2 + $0x30] sm:$0xff]
    %v51 = vld [vmem:[#allocation2 + $0x38] sm:$0xff]
    %v52 = vld [vmem:[#allocation2 + $0x40] sm:$0xff]
    %v53 = vld [vmem:[#allocation2 + $0x48] sm:$0xff]
    %v54 = vld [vmem:[#allocation2 + $0x50] sm:$0xff]
    %v55 = vld [vmem:[#allocation2 + $0x58] sm:$0xff]
    %v56 = vld [vmem:[#allocation2 + $0x60] sm:$0xff]
    %v57 = vld [vmem:[#allocation2 + $0x68] sm:$0xff]
    %v58 = vld [vmem:[#allocation2 + $0x70] sm:$0xff]
    %v59 = vld [vmem:[#allocation2 + $0x78] sm:$0xff]
    %v60 = vld [vmem:[#allocation5] sm:$0xff]
    %v61 = vld [vmem:[#allocation5 + $0x8] sm:$0xff]
    %v62 = vld [vmem:[#allocation5 + $0x10] sm:$0xff]
    %v63 = vld [vmem:[#allocation5 + $0x18] sm:$0xff]
    %v64 = vld [vmem:[#allocation5 + $0x20] sm:$0xff]
    %v65 = vld [vmem:[#allocation5 + $0x28] sm:$0xff]
    %v66 = vld [vmem:[#allocation5 + $0x30] sm:$0xff]
    %v67 = vld [vmem:[#allocation5 + $0x38] sm:$0xff]
    %v68 = vld [vmem:[#allocation5 + $0x40] sm:$0xff]
    %v69 = vld [vmem:[#allocation5 + $0x48] sm:$0xff]
    %v70 = vld [vmem:[#allocation5 + $0x50] sm:$0xff]
    %v71 = vld [vmem:[#allocation5 + $0x58] sm:$0xff]
    %v72 = vld [vmem:[#allocation5 + $0x60] sm:$0xff]
    %v73 = vld [vmem:[#allocation5 + $0x68] sm:$0xff]
    %v74 = vld [vmem:[#allocation5 + $0x70] sm:$0xff]
    %v75 = vld [vmem:[#allocation5 + $0x78] sm:$0xff]
    %v76 = vld [vmem:[#allocation5 + $0x80] sm:$0xff]
    %v77 = vld [vmem:[#allocation5 + $0x88] sm:$0xff]
    %v78 = vld [vmem:[#allocation5 + $0x90] sm:$0xff]
    %v79 = vld [vmem:[#allocation5 + $0x98] sm:$0xff]
    %v80 = vld [vmem:[#allocation5 + $0xa0] sm:$0xff]
    %v81 = vld [vmem:[#allocation5 + $0xa8] sm:$0xff]
    %v82 = vld [vmem:[#allocation5 + $0xb0] sm:$0xff]
    %v83 = vld [vmem:[#allocation5 + $0xb8] sm:$0xff]
    %v84 = vld [vmem:[#allocation5 + $0xc0] sm:$0xff]
    %v85 = vld [vmem:[#allocation5 + $0xc8] sm:$0xff]
    %v86 = vld [vmem:[#allocation5 + $0xd0] sm:$0xff]
    %v87 = vld [vmem:[#allocation5 + $0xd8] sm:$0xff]
    %v88 = vld [vmem:[#allocation5 + $0xe0] sm:$0xff]
    %v89 = vld [vmem:[#allocation5 + $0xe8] sm:$0xff]
    %v90 = vld [vmem:[#allocation5 + $0xf0] sm:$0xff]
    %v91 = vld [vmem:[#allocation5 + $0xf8] sm:$0xff]
    %v92 = vld [vmem:[#allocation5 + $0x100] sm:$0xff]
    %v93 = vld [vmem:[#allocation5 + $0x108] sm:$0xff]
    %v94 = vld [vmem:[#allocation5 + $0x110] sm:$0xff]
    %v95 = vld [vmem:[#allocation5 + $0x118] sm:$0xff]
    %v96 = vld [vmem:[#allocation5 + $0x120] sm:$0xff]
    %v97 = vld [vmem:[#allocation5 + $0x128] sm:$0xff]
    %v98 = vld [vmem:[#allocation5 + $0x130] sm:$0xff]
    %v99 = vld [vmem:[#allocation5 + $0x138] sm:$0xff]
    %v100 = vld [vmem:[#allocation5 + $0x140] sm:$0xff]
    %v101 = vld [vmem:[#allocation5 + $0x148] sm:$0xff]
    %v102 = vld [vmem:[#allocation5 + $0x150] sm:$0xff]
    %v103 = vld [vmem:[#allocation5 + $0x158] sm:$0xff]
    %v104 = vld [vmem:[#allocation5 + $0x160] sm:$0xff]
    %v105 = vld [vmem:[#allocation5 + $0x168] sm:$0xff]
    %v106 = vld [vmem:[#allocation5 + $0x170] sm:$0xff]
    %v107 = vld [vmem:[#allocation5 + $0x178] sm:$0xff]
    %v108 = vld [vmem:[#allocation5 + $0x180] sm:$0xff]
    %v109 = vld [vmem:[#allocation5 + $0x188] sm:$0xff]
    %v110 = vld [vmem:[#allocation5 + $0x190] sm:$0xff]
    %v111 = vld [vmem:[#allocation5 + $0x198] sm:$0xff]
    %v112 = vld [vmem:[#allocation5 + $0x1a0] sm:$0xff]
    %v113 = vld [vmem:[#allocation5 + $0x1a8] sm:$0xff]
    %v114 = vld [vmem:[#allocation5 + $0x1b0] sm:$0xff]
    %v115 = vld [vmem:[#allocation5 + $0x1b8] sm:$0xff]
    %v116 = vld [vmem:[#allocation5 + $0x1c0] sm:$0xff]
    %v117 = vld [vmem:[#allocation5 + $0x1c8] sm:$0xff]
    %v118 = vld [vmem:[#allocation5 + $0x1d0] sm:$0xff]
    %v119 = vld [vmem:[#allocation5 + $0x1d8] sm:$0xff]
    %v120 = vld [vmem:[#allocation5 + $0x1e0] sm:$0xff]
    %v121 = vld [vmem:[#allocation5 + $0x1e8] sm:$0xff]
    %v122 = vld [vmem:[#allocation5 + $0x1f0] sm:$0xff]
    %v123 = vld [vmem:[#allocation5 + $0x1f8] sm:$0xff]
    %v140 = vunpack.c.l.b16 %v44
    %v141 = vunpack.c.h.b16 %v44
    %v142 = vunpack.c.l.b16 %v45
    %v143 = vunpack.c.h.b16 %v45
    %v144 = vunpack.c.l.b16 %v46
    %v145 = vunpack.c.h.b16 %v46
    %v146 = vunpack.c.l.b16 %v47
    %v147 = vunpack.c.h.b16 %v47
    %v148 = vunpack.c.l.b16 %v48
    %v149 = vunpack.c.h.b16 %v48
    %v150 = vunpack.c.l.b16 %v49
    %v151 = vunpack.c.h.b16 %v49
    %v152 = vunpack.c.l.b16 %v50
    %v153 = vunpack.c.h.b16 %v50
    %v154 = vunpack.c.l.b16 %v51
    %v155 = vunpack.c.h.b16 %v51
    %v156 = vunpack.c.l.b16 %v52
    %v157 = vunpack.c.h.b16 %v52
    %v158 = vunpack.c.l.b16 %v53
    %v159 = vunpack.c.h.b16 %v53
    %v160 = vunpack.c.l.b16 %v54
    %v161 = vunpack.c.h.b16 %v54
    %v162 = vunpack.c.l.b16 %v55
    %v163 = vunpack.c.h.b16 %v55
    %v164 = vunpack.c.l.b16 %v56
    %v165 = vunpack.c.h.b16 %v56
    %v166 = vunpack.c.l.b16 %v57
    %v167 = vunpack.c.h.b16 %v57
    %v168 = vunpack.c.l.b16 %v58
    %v169 = vunpack.c.h.b16 %v58
    %v170 = vunpack.c.l.b16 %v59
    %v171 = vunpack.c.h.b16 %v59
    %v172 = vpack.c.b16 %v144, %v140
    %v173 = vpack.c.b16 %v145, %v141
    %v174 = vpack.c.b16 %v146, %v142
    %v175 = vpack.c.b16 %v147, %v143
    %v176 = vpack.c.b16 %v152, %v148
    %v177 = vpack.c.b16 %v153, %v149
    %v178 = vpack.c.b16 %v154, %v150
    %v179 = vpack.c.b16 %v155, %v151
    %v180 = vpack.c.b16 %v160, %v156
    %v181 = vpack.c.b16 %v161, %v157
    %v182 = vpack.c.b16 %v162, %v158
    %v183 = vpack.c.b16 %v163, %v159
    %v184 = vpack.c.b16 %v168, %v164
    %v185 = vpack.c.b16 %v169, %v165
    %v186 = vpack.c.b16 %v170, %v166
    %v187 = vpack.c.b16 %v171, %v167
    %v268 = vunpack.c.l.b16 %v60
    %v269 = vunpack.c.h.b16 %v60
    %v270 = vunpack.c.l.b16 %v61
    %v271 = vunpack.c.h.b16 %v61
    %v272 = vunpack.c.l.b16 %v62
    %v273 = vunpack.c.h.b16 %v62
    %v274 = vunpack.c.l.b16 %v63
    %v275 = vunpack.c.h.b16 %v63
    %v276 = vunpack.c.l.b16 %v64
    %v277 = vunpack.c.h.b16 %v64
    %v278 = vunpack.c.l.b16 %v65
    %v279 = vunpack.c.h.b16 %v65
    %v280 = vunpack.c.l.b16 %v66
    %v281 = vunpack.c.h.b16 %v66
    %v282 = vunpack.c.l.b16 %v67
    %v283 = vunpack.c.h.b16 %v67
    %v284 = vunpack.c.l.b16 %v68
    %v285 = vunpack.c.h.b16 %v68
    %v286 = vunpack.c.l.b16 %v69
    %v287 = vunpack.c.h.b16 %v69
    %v288 = vunpack.c.l.b16 %v70
    %v289 = vunpack.c.h.b16 %v70
    %v290 = vunpack.c.l.b16 %v71
    %v291 = vunpack.c.h.b16 %v71
    %v292 = vunpack.c.l.b16 %v72
    %v293 = vunpack.c.h.b16 %v72
    %v294 = vunpack.c.l.b16 %v73
    %v295 = vunpack.c.h.b16 %v73
    %v296 = vunpack.c.l.b16 %v74
    %v297 = vunpack.c.h.b16 %v74
    %v298 = vunpack.c.l.b16 %v75
    %v299 = vunpack.c.h.b16 %v75
    %v300 = vunpack.c.l.b16 %v76
    %v301 = vunpack.c.h.b16 %v76
    %v302 = vunpack.c.l.b16 %v77
    %v303 = vunpack.c.h.b16 %v77
    %v304 = vunpack.c.l.b16 %v78
    %v305 = vunpack.c.h.b16 %v78
    %v306 = vunpack.c.l.b16 %v79
    %v307 = vunpack.c.h.b16 %v79
    %v308 = vunpack.c.l.b16 %v80
    %v309 = vunpack.c.h.b16 %v80
    %v310 = vunpack.c.l.b16 %v81
    %v311 = vunpack.c.h.b16 %v81
    %v312 = vunpack.c.l.b16 %v82
    %v313 = vunpack.c.h.b16 %v82
    %v314 = vunpack.c.l.b16 %v83
    %v315 = vunpack.c.h.b16 %v83
    %v316 = vunpack.c.l.b16 %v84
    %v317 = vunpack.c.h.b16 %v84
    %v318 = vunpack.c.l.b16 %v85
    %v319 = vunpack.c.h.b16 %v85
    %v320 = vunpack.c.l.b16 %v86
    %v321 = vunpack.c.h.b16 %v86
    %v322 = vunpack.c.l.b16 %v87
    %v323 = vunpack.c.h.b16 %v87
    %v324 = vunpack.c.l.b16 %v88
    %v325 = vunpack.c.h.b16 %v88
    %v326 = vunpack.c.l.b16 %v89
    %v327 = vunpack.c.h.b16 %v89
    %v328 = vunpack.c.l.b16 %v90
    %v329 = vunpack.c.h.b16 %v90
    %v330 = vunpack.c.l.b16 %v91
    %v331 = vunpack.c.h.b16 %v91
    %v332 = vunpack.c.l.b16 %v92
    %v333 = vunpack.c.h.b16 %v92
    %v334 = vunpack.c.l.b16 %v93
    %v335 = vunpack.c.h.b16 %v93
    %v336 = vunpack.c.l.b16 %v94
    %v337 = vunpack.c.h.b16 %v94
    %v338 = vunpack.c.l.b16 %v95
    %v339 = vunpack.c.h.b16 %v95
    %v340 = vunpack.c.l.b16 %v96
    %v341 = vunpack.c.h.b16 %v96
    %v342 = vunpack.c.l.b16 %v97
    %v343 = vunpack.c.h.b16 %v97
    %v344 = vunpack.c.l.b16 %v98
    %v345 = vunpack.c.h.b16 %v98
    %v346 = vunpack.c.l.b16 %v99
    %v347 = vunpack.c.h.b16 %v99
    %v348 = vunpack.c.l.b16 %v100
    %v349 = vunpack.c.h.b16 %v100
    %v350 = vunpack.c.l.b16 %v101
    %v351 = vunpack.c.h.b16 %v101
    %v352 = vunpack.c.l.b16 %v102
    %v353 = vunpack.c.h.b16 %v102
    %v354 = vunpack.c.l.b16 %v103
    %v355 = vunpack.c.h.b16 %v103
    %v356 = vunpack.c.l.b16 %v104
    %v357 = vunpack.c.h.b16 %v104
    %v358 = vunpack.c.l.b16 %v105
    %v359 = vunpack.c.h.b16 %v105
    %v360 = vunpack.c.l.b16 %v106
    %v361 = vunpack.c.h.b16 %v106
    %v362 = vunpack.c.l.b16 %v107
    %v363 = vunpack.c.h.b16 %v107
    %v364 = vunpack.c.l.b16 %v108
    %v365 = vunpack.c.h.b16 %v108
    %v366 = vunpack.c.l.b16 %v109
    %v367 = vunpack.c.h.b16 %v109
    %v368 = vunpack.c.l.b16 %v110
    %v369 = vunpack.c.h.b16 %v110
    %v370 = vunpack.c.l.b16 %v111
    %v371 = vunpack.c.h.b16 %v111
    %v372 = vunpack.c.l.b16 %v112
    %v373 = vunpack.c.h.b16 %v112
    %v374 = vunpack.c.l.b16 %v113
    %v375 = vunpack.c.h.b16 %v113
    %v376 = vunpack.c.l.b16 %v114
    %v377 = vunpack.c.h.b16 %v114
    %v378 = vunpack.c.l.b16 %v115
    %v379 = vunpack.c.h.b16 %v115
    %v380 = vunpack.c.l.b16 %v116
    %v381 = vunpack.c.h.b16 %v116
    %v382 = vunpack.c.l.b16 %v117
    %v383 = vunpack.c.h.b16 %v117
    %v384 = vunpack.c.l.b16 %v118
    %v385 = vunpack.c.h.b16 %v118
    %v386 = vunpack.c.l.b16 %v119
    %v387 = vunpack.c.h.b16 %v119
    %v388 = vunpack.c.l.b16 %v120
    %v389 = vunpack.c.h.b16 %v120
    %v390 = vunpack.c.l.b16 %v121
    %v391 = vunpack.c.h.b16 %v121
    %v392 = vunpack.c.l.b16 %v122
    %v393 = vunpack.c.h.b16 %v122
    %v394 = vunpack.c.l.b16 %v123
    %v395 = vunpack.c.h.b16 %v123
    %v396 = vpack.c.b16 %v270, %v268
    %v397 = vpack.c.b16 %v271, %v269
    %v398 = vpack.c.b16 %v274, %v272
    %v399 = vpack.c.b16 %v275, %v273
    %v400 = vpack.c.b16 %v278, %v276
    %v401 = vpack.c.b16 %v279, %v277
    %v402 = vpack.c.b16 %v282, %v280
    %v403 = vpack.c.b16 %v283, %v281
    %v404 = vpack.c.b16 %v286, %v284
    %v405 = vpack.c.b16 %v287, %v285
    %v406 = vpack.c.b16 %v290, %v288
    %v407 = vpack.c.b16 %v291, %v289
    %v408 = vpack.c.b16 %v294, %v292
    %v409 = vpack.c.b16 %v295, %v293
    %v410 = vpack.c.b16 %v298, %v296
    %v411 = vpack.c.b16 %v299, %v297
    %v412 = vpack.c.b16 %v302, %v300
    %v413 = vpack.c.b16 %v303, %v301
    %v414 = vpack.c.b16 %v306, %v304
    %v415 = vpack.c.b16 %v307, %v305
    %v416 = vpack.c.b16 %v310, %v308
    %v417 = vpack.c.b16 %v311, %v309
    %v418 = vpack.c.b16 %v314, %v312
    %v419 = vpack.c.b16 %v315, %v313
    %v420 = vpack.c.b16 %v318, %v316
    %v421 = vpack.c.b16 %v319, %v317
    %v422 = vpack.c.b16 %v322, %v320
    %v423 = vpack.c.b16 %v323, %v321
    %v424 = vpack.c.b16 %v326, %v324
    %v425 = vpack.c.b16 %v327, %v325
    %v426 = vpack.c.b16 %v330, %v328
    %v427 = vpack.c.b16 %v331, %v329
    %v428 = vpack.c.b16 %v334, %v332
    %v429 = vpack.c.b16 %v335, %v333
    %v430 = vpack.c.b16 %v338, %v336
    %v431 = vpack.c.b16 %v339, %v337
    %v432 = vpack.c.b16 %v342, %v340
    %v433 = vpack.c.b16 %v343, %v341
    %v434 = vpack.c.b16 %v346, %v344
    %v435 = vpack.c.b16 %v347, %v345
    %v436 = vpack.c.b16 %v350, %v348
    %v437 = vpack.c.b16 %v351, %v349
    %v438 = vpack.c.b16 %v354, %v352
    %v439 = vpack.c.b16 %v355, %v353
    %v440 = vpack.c.b16 %v358, %v356
    %v441 = vpack.c.b16 %v359, %v357
    %v442 = vpack.c.b16 %v362, %v360
    %v443 = vpack.c.b16 %v363, %v361
    %v444 = vpack.c.b16 %v366, %v364
    %v445 = vpack.c.b16 %v367, %v365
    %v446 = vpack.c.b16 %v370, %v368
    %v447 = vpack.c.b16 %v371, %v369
    %v448 = vpack.c.b16 %v374, %v372
    %v449 = vpack.c.b16 %v375, %v373
    %v450 = vpack.c.b16 %v378, %v376
    %v451 = vpack.c.b16 %v379, %v377
    %v452 = vpack.c.b16 %v382, %v380
    %v453 = vpack.c.b16 %v383, %v381
    %v454 = vpack.c.b16 %v386, %v384
    %v455 = vpack.c.b16 %v387, %v385
    %v456 = vpack.c.b16 %v390, %v388
    %v457 = vpack.c.b16 %v391, %v389
    %v458 = vpack.c.b16 %v394, %v392
    %v459 = vpack.c.b16 %v395, %v393
    %524 = vmatpush.bf16.msra.mxu0 %v410
    %525 = vmatpush.bf16.msra.mxu0 %v408
    %526 = vmatpush.bf16.msra.mxu0 %v406
    %527 = vmatpush.bf16.msra.mxu0 %v404
    %528 = vmatpush.bf16.msra.mxu0 %v402
    %529 = vmatpush.bf16.msra.mxu0 %v400
    %530 = vmatpush.bf16.msra.mxu0 %v398
    %531 = vmatpush.bf16.msra.mxu0 %v396
    %532 = vmatmul.bf16.gmra.mxu0 %v172
    %v533 = vpop.f32.mrf.mxu0
    %v534 = vadd.f32 0.0, %v533
    %v535 = vpop.f32.mrf.mxu0
    %v536 = vadd.f32 0.0, %v535
    %537 = vmatmul.bf16.gmra.mxu0 %v176
    %v538 = vpop.f32.mrf.mxu0
    %v539 = vadd.f32 0.0, %v538
    %v540 = vpop.f32.mrf.mxu0
    %v541 = vadd.f32 0.0, %v540
    %542 = vmatmul.bf16.gmra.mxu0 %v180
    %v543 = vpop.f32.mrf.mxu0
    %v544 = vadd.f32 0.0, %v543
    %v545 = vpop.f32.mrf.mxu0
    %v546 = vadd.f32 0.0, %v545
    %547 = vmatmul.bf16.gmra.mxu0 %v184
    %v548 = vpop.f32.mrf.mxu0
    %v549 = vadd.f32 0.0, %v548
    %v550 = vpop.f32.mrf.mxu0
    %v551 = vadd.f32 0.0, %v550
    %552 = vdwg.mxu0
    %553 = vmatpush.bf16.msra.mxu0 %v426
    %554 = vmatpush.bf16.msra.mxu0 %v424
    %555 = vmatpush.bf16.msra.mxu0 %v422
    %556 = vmatpush.bf16.msra.mxu0 %v420
    %557 = vmatpush.bf16.msra.mxu0 %v418
    %558 = vmatpush.bf16.msra.mxu0 %v416
    %559 = vmatpush.bf16.msra.mxu0 %v414
    %560 = vmatpush.bf16.msra.mxu0 %v412
    %561 = vmatmul.bf16.gmra.mxu0 %v173
    %v562 = vpop.f32.mrf.mxu0
    %v563 = vadd.f32 %v534, %v562
    %v564 = vpop.f32.mrf.mxu0
    %v565 = vadd.f32 %v536, %v564
    %566 = vmatmul.bf16.gmra.mxu0 %v177
    %v567 = vpop.f32.mrf.mxu0
    %v568 = vadd.f32 %v539, %v567
    %v569 = vpop.f32.mrf.mxu0
    %v570 = vadd.f32 %v541, %v569
    %571 = vmatmul.bf16.gmra.mxu0 %v181
    %v572 = vpop.f32.mrf.mxu0
    %v573 = vadd.f32 %v544, %v572
    %v574 = vpop.f32.mrf.mxu0
    %v575 = vadd.f32 %v546, %v574
    %576 = vmatmul.bf16.gmra.mxu0 %v185
    %v577 = vpop.f32.mrf.mxu0
    %v578 = vadd.f32 %v549, %v577
    %v579 = vpop.f32.mrf.mxu0
    %v580 = vadd.f32 %v551, %v579
    %581 = vdwg.mxu0
    %582 = vmatpush.bf16.msra.mxu0 %v442
    %583 = vmatpush.bf16.msra.mxu0 %v440
    %584 = vmatpush.bf16.msra.mxu0 %v438
    %585 = vmatpush.bf16.msra.mxu0 %v436
    %586 = vmatpush.bf16.msra.mxu0 %v434
    %587 = vmatpush.bf16.msra.mxu0 %v432
    %588 = vmatpush.bf16.msra.mxu0 %v430
    %589 = vmatpush.bf16.msra.mxu0 %v428
    %590 = vmatmul.bf16.gmra.mxu0 %v174
    %v591 = vpop.f32.mrf.mxu0
    %v592 = vadd.f32 %v563, %v591
    %v593 = vpop.f32.mrf.mxu0
    %v594 = vadd.f32 %v565, %v593
    %595 = vmatmul.bf16.gmra.mxu0 %v178
    %v596 = vpop.f32.mrf.mxu0
    %v597 = vadd.f32 %v568, %v596
    %v598 = vpop.f32.mrf.mxu0
    %v599 = vadd.f32 %v570, %v598
    %600 = vmatmul.bf16.gmra.mxu0 %v182
    %v601 = vpop.f32.mrf.mxu0
    %v602 = vadd.f32 %v573, %v601
    %v603 = vpop.f32.mrf.mxu0
    %v604 = vadd.f32 %v575, %v603
    %605 = vmatmul.bf16.gmra.mxu0 %v186
    %v606 = vpop.f32.mrf.mxu0
    %v607 = vadd.f32 %v578, %v606
    %v608 = vpop.f32.mrf.mxu0
    %v609 = vadd.f32 %v580, %v608
    %610 = vdwg.mxu0
    %611 = vmatpush.bf16.msra.mxu0 %v458
    %612 = vmatpush.bf16.msra.mxu0 %v456
    %613 = vmatpush.bf16.msra.mxu0 %v454
    %614 = vmatpush.bf16.msra.mxu0 %v452
    %615 = vmatpush.bf16.msra.mxu0 %v450
    %616 = vmatpush.bf16.msra.mxu0 %v448
    %617 = vmatpush.bf16.msra.mxu0 %v446
    %618 = vmatpush.bf16.msra.mxu0 %v444
    %619 = vmatmul.bf16.gmra.mxu0 %v175
    %v620 = vpop.f32.mrf.mxu0
    %v621 = vadd.f32 %v592, %v620
    %v622 = vpop.f32.mrf.mxu0
    %v623 = vadd.f32 %v594, %v622
    %624 = vmatmul.bf16.gmra.mxu0 %v179
    %v625 = vpop.f32.mrf.mxu0
    %v626 = vadd.f32 %v597, %v625
    %v627 = vpop.f32.mrf.mxu0
    %v628 = vadd.f32 %v599, %v627
    %629 = vmatmul.bf16.gmra.mxu0 %v183
    %v630 = vpop.f32.mrf.mxu0
    %v631 = vadd.f32 %v602, %v630
    %v632 = vpop.f32.mrf.mxu0
    %v633 = vadd.f32 %v604, %v632
    %634 = vmatmul.bf16.gmra.mxu0 %v187
    %v635 = vpop.f32.mrf.mxu0
    %v636 = vadd.f32 %v607, %v635
    %v637 = vpop.f32.mrf.mxu0
    %v638 = vadd.f32 %v609, %v637
    %639 = vdwg.mxu0
    %640 = vmatpush.bf16.msra.mxu0 %v411
    %641 = vmatpush.bf16.msra.mxu0 %v409
    %642 = vmatpush.bf16.msra.mxu0 %v407
    %643 = vmatpush.bf16.msra.mxu0 %v405
    %644 = vmatpush.bf16.msra.mxu0 %v403
    %645 = vmatpush.bf16.msra.mxu0 %v401
    %646 = vmatpush.bf16.msra.mxu0 %v399
    %647 = vmatpush.bf16.msra.mxu0 %v397
    %648 = vmatmul.bf16.gmra.mxu0 %v172
    %v649 = vpop.f32.mrf.mxu0
    %v650 = vadd.f32 0.0, %v649
    %v651 = vpop.f32.mrf.mxu0
    %v652 = vadd.f32 0.0, %v651
    %653 = vmatmul.bf16.gmra.mxu0 %v176
    %v654 = vpop.f32.mrf.mxu0
    %v655 = vadd.f32 0.0, %v654
    %v656 = vpop.f32.mrf.mxu0
    %v657 = vadd.f32 0.0, %v656
    %658 = vmatmul.bf16.gmra.mxu0 %v180
    %v659 = vpop.f32.mrf.mxu0
    %v660 = vadd.f32 0.0, %v659
    %v661 = vpop.f32.mrf.mxu0
    %v662 = vadd.f32 0.0, %v661
    %663 = vmatmul.bf16.gmra.mxu0 %v184
    %v664 = vpop.f32.mrf.mxu0
    %v665 = vadd.f32 0.0, %v664
    %v666 = vpop.f32.mrf.mxu0
    %v667 = vadd.f32 0.0, %v666
    %668 = vdwg.mxu0
    %669 = vmatpush.bf16.msra.mxu0 %v427
    %670 = vmatpush.bf16.msra.mxu0 %v425
    %671 = vmatpush.bf16.msra.mxu0 %v423
    %672 = vmatpush.bf16.msra.mxu0 %v421
    %673 = vmatpush.bf16.msra.mxu0 %v419
    %674 = vmatpush.bf16.msra.mxu0 %v417
    %675 = vmatpush.bf16.msra.mxu0 %v415
    %676 = vmatpush.bf16.msra.mxu0 %v413
    %677 = vmatmul.bf16.gmra.mxu0 %v173
    %v678 = vpop.f32.mrf.mxu0
    %v679 = vadd.f32 %v650, %v678
    %v680 = vpop.f32.mrf.mxu0
    %v681 = vadd.f32 %v652, %v680
    %682 = vmatmul.bf16.gmra.mxu0 %v177
    %v683 = vpop.f32.mrf.mxu0
    %v684 = vadd.f32 %v655, %v683
    %v685 = vpop.f32.mrf.mxu0
    %v686 = vadd.f32 %v657, %v685
    %687 = vmatmul.bf16.gmra.mxu0 %v181
    %v688 = vpop.f32.mrf.mxu0
    %v689 = vadd.f32 %v660, %v688
    %v690 = vpop.f32.mrf.mxu0
    %v691 = vadd.f32 %v662, %v690
    %692 = vmatmul.bf16.gmra.mxu0 %v185
    %v693 = vpop.f32.mrf.mxu0
    %v694 = vadd.f32 %v665, %v693
    %v695 = vpop.f32.mrf.mxu0
    %v696 = vadd.f32 %v667, %v695
    %697 = vdwg.mxu0
    %698 = vmatpush.bf16.msra.mxu0 %v443
    %699 = vmatpush.bf16.msra.mxu0 %v441
    %700 = vmatpush.bf16.msra.mxu0 %v439
    %701 = vmatpush.bf16.msra.mxu0 %v437
    %702 = vmatpush.bf16.msra.mxu0 %v435
    %703 = vmatpush.bf16.msra.mxu0 %v433
    %704 = vmatpush.bf16.msra.mxu0 %v431
    %705 = vmatpush.bf16.msra.mxu0 %v429
    %706 = vmatmul.bf16.gmra.mxu0 %v174
    %v707 = vpop.f32.mrf.mxu0
    %v708 = vadd.f32 %v679, %v707
    %v709 = vpop.f32.mrf.mxu0
    %v710 = vadd.f32 %v681, %v709
    %711 = vmatmul.bf16.gmra.mxu0 %v178
    %v712 = vpop.f32.mrf.mxu0
    %v713 = vadd.f32 %v684, %v712
    %v714 = vpop.f32.mrf.mxu0
    %v715 = vadd.f32 %v686, %v714
    %716 = vmatmul.bf16.gmra.mxu0 %v182
    %v717 = vpop.f32.mrf.mxu0
    %v718 = vadd.f32 %v689, %v717
    %v719 = vpop.f32.mrf.mxu0
    %v720 = vadd.f32 %v691, %v719
    %721 = vmatmul.bf16.gmra.mxu0 %v186
    %v722 = vpop.f32.mrf.mxu0
    %v723 = vadd.f32 %v694, %v722
    %v724 = vpop.f32.mrf.mxu0
    %v725 = vadd.f32 %v696, %v724
    %726 = vdwg.mxu0
    %727 = vmatpush.bf16.msra.mxu0 %v459
    %728 = vmatpush.bf16.msra.mxu0 %v457
    %729 = vmatpush.bf16.msra.mxu0 %v455
    %730 = vmatpush.bf16.msra.mxu0 %v453
    %731 = vmatpush.bf16.msra.mxu0 %v451
    %732 = vmatpush.bf16.msra.mxu0 %v449
    %733 = vmatpush.bf16.msra.mxu0 %v447
    %734 = vmatpush.bf16.msra.mxu0 %v445
    %735 = vmatmul.bf16.gmra.mxu0 %v175
    %v736 = vpop.f32.mrf.mxu0
    %v737 = vadd.f32 %v708, %v736
    %v738 = vpop.f32.mrf.mxu0
    %v739 = vadd.f32 %v710, %v738
    %740 = vmatmul.bf16.gmra.mxu0 %v179
    %v741 = vpop.f32.mrf.mxu0
    %v742 = vadd.f32 %v713, %v741
    %v743 = vpop.f32.mrf.mxu0
    %v744 = vadd.f32 %v715, %v743
    %745 = vmatmul.bf16.gmra.mxu0 %v183
    %v746 = vpop.f32.mrf.mxu0
    %v747 = vadd.f32 %v718, %v746
    %v748 = vpop.f32.mrf.mxu0
    %v749 = vadd.f32 %v720, %v748
    %750 = vmatmul.bf16.gmra.mxu0 %v187
    %v751 = vpop.f32.mrf.mxu0
    %v752 = vadd.f32 %v723, %v751
    %v753 = vpop.f32.mrf.mxu0
    %v754 = vadd.f32 %v725, %v753
    %755 = vdwg.mxu0
    %v756 = vpack.c.bf16 %v737, %v621
    %v757 = vpack.c.bf16 %v739, %v623
    %v758 = vpack.c.bf16 %v742, %v626
    %v759 = vpack.c.bf16 %v744, %v628
    %v760 = vpack.c.bf16 %v747, %v631
    %v761 = vpack.c.bf16 %v749, %v633
    %v762 = vpack.c.bf16 %v752, %v636
    %v763 = vpack.c.bf16 %v754, %v638
    %764 = vst [vmem:[#allocation7] sm:$0xff] %v756
    %765 = vst [vmem:[#allocation7 + $0x8] sm:$0xff] %v757
    %766 = vst [vmem:[#allocation7 + $0x10] sm:$0xff] %v758
    %767 = vst [vmem:[#allocation7 + $0x18] sm:$0xff] %v759
    %768 = vst [vmem:[#allocation7 + $0x20] sm:$0xff] %v760
    %769 = vst [vmem:[#allocation7 + $0x28] sm:$0xff] %v761
    %770 = vst [vmem:[#allocation7 + $0x30] sm:$0xff] %v762
    %771 = vst [vmem:[#allocation7 + $0x38] sm:$0xff] %v763
    // Predicated region
    $region18: #{tpu_custom_call.1} parent=1 // pred_check
      _
    $region19: #{tpu_custom_call.1} parent=1 // pred_check_branch
      %773 = sbr.rel (0) target = $region21
    $region20: #{tpu_custom_call.1} parent=1 // pred_region
      %775 = vsyncadd [#allocation4], 0
      %s776 = sshll.u32 [#allocation7], 4
      %s777 = int_to_ptr.vmem [resolvable:$true] %s776
      %s778 = sshll.u32 %s2, 4
      %s779 = int_to_ptr.hbm [resolvable:$true] %s778
      %784 = dma.vmem_to_hbm [thread:$0]  %s777, 1024, %s779, [#allocation4], 128, 128, 8
    $region21: #{tpu_custom_call.1} parent=1 // pred_fallthru
      _
    // Predicated region
    $region22: #{tpu_custom_call.1} parent=1 // pred_check
      _
    $region23: #{tpu_custom_call.1} parent=1 // pred_check_branch
      %786 = sbr.rel (0) target = $region25
    $region24: #{tpu_custom_call.1} parent=1 // pred_region
      %788 = dma.done [#allocation4], 1024
    $region25: #{tpu_custom_call.1} parent=1 // pred_fallthru
      _
    %789 = vsyncpa [#allocation3], 1
    %790 = vsyncpa [#allocation6], 1
    %791 = vsyncpa [#allocation4], 1

</llo_original>
